<compile_context>
chip_gen: v7x
topology: tpu7x:2x2x1
jax: 0.10.0
libtpu: 0.0.40
codegen_flags: <defaults>
</compile_context>

<pallas_src>
import jax
import jax.numpy as jnp
from jax.experimental import pallas as pl
from jax.experimental.pallas import tpu as pltpu


def _identity_kernel(x_ref, o_ref):
    # Elementwise identity: straight tile copy (pure DMA-bound streaming).
    o_ref[...] = x_ref[...]


def _lane_dense_2d(shape, total):
    """Pick a (rows, cols) factorization with cols a multiple of 128 when
    possible (lane-dense output -> unmasked vector stores)."""
    if total % 128 == 0:
        cols = min(2048, total)
        cols = (cols // 128) * 128
        while cols >= 128 and total % cols != 0:
            cols -= 128
        if cols >= 128:
            return total // cols, cols
    # Fallback: keep the original trailing dim as the lane axis.
    if len(shape) == 0:
        return 1, 1
    if len(shape) == 1:
        return 1, shape[0]
    return total // shape[-1], shape[-1]


def _pick_tile(dim, unit, cap):
    """Largest tile <= cap that is a multiple of `unit` (preferring an even
    divisor of `dim`); full-extent block only when the whole dim fits the cap.
    Never falls back to a full-extent block on a large non-divisible dim."""
    if dim <= cap:
        return dim
    top = (cap // unit) * unit
    for cand in range(top, unit - 1, -unit):
        if dim % cand == 0:
            return cand
    return top  # ragged last block is handled by Pallas via the cdiv grid


def identity(x: jax.Array) -> jax.Array:
    """Pallas TPU identity: returns an array equal to x (same shape & dtype)."""
    if x.size == 0:
        return x  # degenerate: nothing to copy

    orig_shape = x.shape
    itemsize = jnp.dtype(x.dtype).itemsize

    R, C = _lane_dense_2d(orig_shape, x.size)
    x2 = x.reshape(R, C)

    # dtype-aware sublane unit: 8 rows f32, 16 rows bf16, 32 rows int8/fp8.
    unit_r = max(8, 32 // itemsize)
    block_bytes = 4 * 1024 * 1024  # ~4 MiB per block

    tc = _pick_tile(C, 128, 2048)
    tr_cap = max(unit_r, (block_bytes // max(1, tc * itemsize)) // unit_r * unit_r)
    tr = _pick_tile(R, unit_r, tr_cap)

    # If the whole array fits a single grid step but is big enough to matter,
    # split rows in two so v7x's two TensorCores can shard the copy.
    if (pl.cdiv(R, tr) == 1 and pl.cdiv(C, tc) == 1
            and x.size * itemsize >= (1 << 20) and R >= 2 * unit_r):
        tr = max(unit_r, pl.cdiv(pl.cdiv(R, 2), unit_r) * unit_r)

    grid = (pl.cdiv(R, tr), pl.cdiv(C, tc))

    out = pl.pallas_call(
        _identity_kernel,
        out_shape=jax.ShapeDtypeStruct((R, C), x.dtype),
        grid=grid,
        in_specs=[pl.BlockSpec((tr, tc), lambda i, j: (i, j))],
        out_specs=pl.BlockSpec((tr, tc), lambda i, j: (i, j)),
        input_output_aliases={0: 0},  # output reuses the input buffer
        compiler_params=pltpu.CompilerParams(
            dimension_semantics=("parallel", "parallel"),
            vmem_limit_bytes=32 * 1024 * 1024,
        ),
    )(x2)

    return out.reshape(orig_shape)


if __name__ == "__main__":
    key = jax.random.PRNGKey(0)
    # Small NCHW input consistent with a conv-style module: batch=2, C=4, 16x16.
    x = jax.random.normal(key, (2, 4, 16, 16), dtype=jnp.float32)

    y = identity(x)
    y = jax.block_until_ready(y)

    assert y.shape == x.shape, (y.shape, x.shape)
    assert y.dtype == x.dtype, (y.dtype, x.dtype)
    assert bool(jnp.all(y == x)), "identity output mismatch"

    print("KERNEL_OK")
</pallas_src>

<mosaic_0001>
module attributes {stable_mosaic.version = 11 : i64} {
  func.func @_identity_kernel(%arg0: i32, %arg1: i32, %arg2: memref<1x2048xf32, #tpu.memory_space<vmem>>, %arg3: memref<1x2048xf32, #tpu.memory_space<vmem>>) attributes {dimension_semantics = [#tpu.dimension_semantics<parallel>, #tpu.dimension_semantics<parallel>], iteration_bounds = array<i64: 1, 1>, scalar_prefetch = 0 : i64, scratch_operands = 0 : i64, tpu.core_type = #tpu.core_type<tc>, window_params = [{transform_indices = @transform_0, window_bounds = array<i64: 1, 2048>}, {transform_indices = @transform_1, window_bounds = array<i64: 1, 2048>}]} {
    %c0 = arith.constant 0 : index
    %c0_0 = arith.constant 0 : index
    %0 = vector.load %arg2[%c0, %c0_0] : memref<1x2048xf32, #tpu.memory_space<vmem>>, vector<1x2048xf32>
    %c0_1 = arith.constant 0 : index
    %c0_2 = arith.constant 0 : index
    %1 = vector.load %arg3[%c0_1, %c0_2] : memref<1x2048xf32, #tpu.memory_space<vmem>>, vector<1x2048xf32>
    tpu.vector_store %arg3[%c0_1, %c0_2], %0 {strides = array<i32>} : memref<1x2048xf32, #tpu.memory_space<vmem>>, vector<1x2048xf32>,
    return
  }
  func.func @transform_0(%arg0: i32, %arg1: i32) -> (i32, i32) {
    %c0_i32 = arith.constant 0 : i32
    return %arg0, %arg1 : i32, i32
  }
  func.func @transform_1(%arg0: i32, %arg1: i32) -> (i32, i32) {
    %c0_i32 = arith.constant 0 : i32
    return %arg0, %arg1 : i32, i32
  }
}

</mosaic_0001>

<llo_original>
// kernel: tpu_custom_call.1
$region0: #{tpu_custom_call.1}
  #allocation0 [shape = 'u32[]', space=smem, size = 0x4, offset = 0x4, fixed_abs, tag = 'smem constant byte address 0x4 - core index']
  #allocation1 [shape = 'u32[144,128]{1,0:T(1,128)}', space=vmem, size = 0x12000, scoped, tag = 'internal scratch']
  %s0 = inlined_call_operand.hbm [shape: f32[1,2048], index: 0, kind: input, shape index: {}, may-alias: {0,1}]
  %s1 = inlined_call_operand.hbm [shape: f32[1,2048], index: 1, kind: output, shape index: {}, may-alias: {0,1}]
  %s2 = sld [smem:[#allocation0]]
  $region18: #{tpu_custom_call.1} parent=0
    _
  %s4 = ssub.s32 1, %s2
  %s5 = scalar_select 0, %s4, %s2
  $region1: #{tpu_custom_call.1} parent=0
    #allocation2 [shape = 'u8[8192]{0}', space=vmem, size = 0x2000, scoped, tag = 'input window, operand 0, single buffered']
    #allocation3 [shape = 's32[1]{0}', space=sflag, size = 0x4, scoped, tag = 'scoped memory for tpu_custom_call.1']
    #allocation4 [shape = 's32[1]{0}', space=sflag, size = 0x4, scoped, tag = 'scoped memory for tpu_custom_call.1']
    #allocation5 [shape = 'u8[8192]{0}', space=vmem, size = 0x2000, scoped, tag = 'output window, operand 0, single buffered']
    %6 = vsyncpa [#allocation3], 0
    %7 = vsyncpa [#allocation4], 0
    // Predicated region
    $region2: #{tpu_custom_call.1} parent=1 // pred_check
      _
    $region3: #{tpu_custom_call.1} parent=1 // pred_check_branch
      %9 = sbr.rel (0) target = $region5
    $region4: #{tpu_custom_call.1} parent=1 // pred_region
      %s11 = ssub.s32 256, 256
      %12 = vsyncadd [#allocation3], %s11
      %s14 = sshll.u32 [#allocation2], 4
      %s15 = int_to_ptr.vmem [resolvable:$true] %s14
      %17 = dma.hbm_to_vmem [thread:$0]  %s0, 256, %s15, [#allocation3]
    $region5: #{tpu_custom_call.1} parent=1 // pred_fallthru
      _
    // Predicated region
    $region6: #{tpu_custom_call.1} parent=1 // pred_check
      _
    $region7: #{tpu_custom_call.1} parent=1 // pred_check_branch
      %19 = sbr.rel (0) target = $region9
    $region8: #{tpu_custom_call.1} parent=1 // pred_region
      %20 = dma.done [#allocation3], 256
    $region9: #{tpu_custom_call.1} parent=1 // pred_fallthru
      _
    %v21 = vld [vmem:[#allocation2] sm:$0xff]
    %v22 = vld [vmem:[#allocation2 + $0x8] sm:$0xff]
    %23 = vst [vmem:[#allocation5] sm:$0xff] %v21
    %24 = vst [vmem:[#allocation5 + $0x8] sm:$0xff] %v22
    // Predicated region
    $region10: #{tpu_custom_call.1} parent=1 // pred_check
      _
    $region11: #{tpu_custom_call.1} parent=1 // pred_check_branch
      %26 = sbr.rel (0) target = $region13
    $region12: #{tpu_custom_call.1} parent=1 // pred_region
      %s28 = ssub.s32 256, 256
      %29 = vsyncadd [#allocation4], %s28
      %s31 = sshll.u32 [#allocation5], 4
      %s32 = int_to_ptr.vmem [resolvable:$true] %s31
      %34 = dma.vmem_to_hbm [thread:$0]  %s32, 256, %s1, [#allocation4]
    $region13: #{tpu_custom_call.1} parent=1 // pred_fallthru
      _
    // Predicated region
    $region14: #{tpu_custom_call.1} parent=1 // pred_check
      _
    $region15: #{tpu_custom_call.1} parent=1 // pred_check_branch
      %36 = sbr.rel (0) target = $region17
    $region16: #{tpu_custom_call.1} parent=1 // pred_region
      %37 = dma.done [#allocation4], 256
    $region17: #{tpu_custom_call.1} parent=1 // pred_fallthru
      _
    %38 = vsyncpa [#allocation3], 1
    %39 = vsyncpa [#allocation4], 1

</llo_original>
